<compile_context>
chip_gen: v5e
topology: v5e:2x2
jax: 0.10.0
libtpu: 0.0.40
codegen_flags: <defaults>
</compile_context>

<pallas_src>
import functools

import jax
import jax.numpy as jnp
from jax.experimental import pallas as pl
from jax.experimental.pallas import tpu as pltpu


_SMALL_K = 8  # below this, a CONTRACTION dim is cheaper on the VPU than the MXU


def _round_up(x: int, m: int) -> int:
    return ((x + m - 1) // m) * m


def _pinn_fused_kernel(*refs, n_layers: int, mxu_dtype):
    """refs = (x_ref, w0, b0, w1, b1, ..., o_ref); activations are (feat, tm)."""
    x_ref = refs[0]
    o_ref = refs[-1]
    wb_refs = refs[1:-1]

    h = x_ref[...].astype(jnp.float32)            # (in_dim, tm), batch on lanes
    for layer in range(n_layers):
        w = wb_refs[2 * layer][...]               # (out_l, in_l) PyTorch layout
        b = wb_refs[2 * layer + 1][...]           # (out_l, 1)
        _, in_l = w.shape
        if in_l <= _SMALL_K:
            # Tiny K only (e.g. first layer, K=3): MXU fill/drain would dwarf
            # the useful work -> unrolled broadcast-FMAs on the VPU, kept f32
            # (v5e VPU has no bf16).
            y = b
            for k in range(in_l):
                y = y + w[:, k:k + 1] * h[k:k + 1, :]
        else:
            # 32x32 hidden layers and the (3, 32) output layer: MXU with f32
            # accumulation.  mxu_dtype=bf16 cuts MXU passes ~3x on v6e/v7x.
            y = jnp.dot(w.astype(mxu_dtype), h.astype(mxu_dtype),
                        preferred_element_type=jnp.float32) + b
        if layer < n_layers - 1:
            y = jnp.tanh(y)                       # EUP, f32
        h = y
    o_ref[...] = h.astype(o_ref.dtype)


def pinn_forward_fm(xt, params, *, tile_m: int = 8192, mxu_dtype=jnp.float32):
    """Feature-major forward: xt is (in_dim, batch) -> (out_dim, batch).

    This is the zero-plumbing path: keep the (features, batch) layout in the
    caller and no transposes / unconditional pads are performed.
    """
    in_dim, n = xt.shape
    n_layers = len(params)
    out_dim = params[-1][0].shape[0]

    # Tile choice: multiple of the 128-lane width; large enough to amortize the
    # ~0.35 us per-step overhead; capped so live activations + double-buffered
    # I/O blocks stay inside the default scoped-VMEM budget on all generations.
    tile_m = _round_up(min(max(tile_m, 128), 16384), 128)

    tm = tile_m
    if 2 * 128 <= n <= 2 * tile_m:
        # Guarantee at least 2 grid steps so v7x's two TensorCores both get
        # work on the "parallel" batch axis (no cost on single-TC v5e/v6e).
        tm = _round_up(pl.cdiv(n, 2), 128)
    tm = max(128, min(tm, _round_up(n, 128)))

    n_pad = _round_up(n, tm)
    if n_pad != n:                                # conditional; typical batches skip it
        xt = jnp.pad(xt, ((0, 0), (0, n_pad - n)))

    in_specs = [pl.BlockSpec((in_dim, tm), lambda i: (0, i))]
    args = [xt]
    for w, b in params:
        # Full (untiled) weight/bias blocks; same block index every step ->
        # fetched into VMEM once and kept resident.
        in_specs.append(pl.BlockSpec(w.shape, lambda i: (0, 0)))
        in_specs.append(pl.BlockSpec(b.shape, lambda i: (0, 0)))
        args += [w, b]

    out = pl.pallas_call(
        functools.partial(_pinn_fused_kernel, n_layers=n_layers,
                          mxu_dtype=mxu_dtype),
        out_shape=jax.ShapeDtypeStruct((out_dim, n_pad), xt.dtype),
        grid=(n_pad // tm,),
        in_specs=in_specs,
        out_specs=pl.BlockSpec((out_dim, tm), lambda i: (0, i)),
        compiler_params=pltpu.CompilerParams(
            dimension_semantics=("parallel",),    # megacore split on v7x
        ),
    )(*args)

    return out[:, :n] if n_pad != n else out


def pinn_forward(x, params, *, tile_m: int = 8192, mxu_dtype=jnp.float32):
    """PyTorch-layout forward: x is (batch, in_dim) -> (batch, out_dim).

    For large collocation batches prefer `pinn_forward_fm` and keep the
    (features, batch) layout end-to-end; this wrapper adds two cheap
    transposes over the 3-wide input/output only.
    """
    return pinn_forward_fm(x.T, params, tile_m=tile_m, mxu_dtype=mxu_dtype).T


def init_pinn_params(layers, key):
    """nn.Linear-style init U(-1/sqrt(fan_in), 1/sqrt(fan_in)).

    Weights are stored (out, in) (same as PyTorch), biases as (out, 1) columns
    so the kernel can add them directly in the (features, batch) layout.
    """
    params = []
    for i in range(len(layers) - 1):
        fan_in, fan_out = layers[i], layers[i + 1]
        key, kw, kb = jax.random.split(key, 3)
        bound = 1.0 / float(fan_in) ** 0.5
        w = jax.random.uniform(kw, (fan_out, fan_in), jnp.float32, -bound, bound)
        b = jax.random.uniform(kb, (fan_out, 1), jnp.float32, -bound, bound)
        params.append((w, b))
    return params


def pinn_forward_ref(x, params):
    """Pure-JAX reference (PyTorch semantics) for correctness check."""
    n_layers = len(params)
    for i, (w, b) in enumerate(params):
        x = x @ w.T + b[:, 0]
        if i < n_layers - 1:
            x = jnp.tanh(x)
    return x


if __name__ == "__main__":
    # PINN for turbulence: inputs (x, y, t) -> outputs (u, v, p)
    layers = [3, 32, 32, 32, 3]
    batch = 256

    key = jax.random.PRNGKey(0)
    key, kx = jax.random.split(key)
    x = jax.random.normal(kx, (batch, layers[0]), jnp.float32)
    params = init_pinn_params(layers, key)

    ref = pinn_forward_ref(x, params)

    # f32 MXU path (default; recommended on v5e).
    out = jax.block_until_ready(pinn_forward(x, params))
    assert out.shape == (batch, layers[-1])
    assert float(jnp.max(jnp.abs(out - ref))) < 1e-4, "mismatch vs reference"

    # bf16 MXU-input path (recommended on v6e/v7x); f32 accumulation, so only
    # a loose tolerance check here.
    out_bf16 = jax.block_until_ready(
        pinn_forward(x, params, mxu_dtype=jnp.bfloat16))
    assert out_bf16.shape == (batch, layers[-1])
    assert float(jnp.max(jnp.abs(out_bf16 - ref))) < 1e-1, "bf16 path mismatch"

    print("KERNEL_OK")
</pallas_src>

<mosaic_0001>
module attributes {stable_mosaic.version = 11 : i64} {
  func.func @_pinn_fused_kernel(%arg0: i32, %arg1: memref<3x128xf32, #tpu.memory_space<vmem>>, %arg2: memref<32x3xf32, #tpu.memory_space<vmem>>, %arg3: memref<32x1xf32, #tpu.memory_space<vmem>>, %arg4: memref<32x32xf32, #tpu.memory_space<vmem>>, %arg5: memref<32x1xf32, #tpu.memory_space<vmem>>, %arg6: memref<32x32xf32, #tpu.memory_space<vmem>>, %arg7: memref<32x1xf32, #tpu.memory_space<vmem>>, %arg8: memref<3x32xf32, #tpu.memory_space<vmem>>, %arg9: memref<3x1xf32, #tpu.memory_space<vmem>>, %arg10: memref<3x128xf32, #tpu.memory_space<vmem>>) attributes {dimension_semantics = [#tpu.dimension_semantics<parallel>], iteration_bounds = array<i64: 2>, scalar_prefetch = 0 : i64, scratch_operands = 0 : i64, tpu.core_type = #tpu.core_type<tc>, window_params = [{transform_indices = @transform_0, window_bounds = array<i64: 3, 128>}, {pipeline_mode = #tpu.pipeline_mode<synchronous>, transform_indices = @transform_1, window_bounds = array<i64: 32, 3>}, {pipeline_mode = #tpu.pipeline_mode<synchronous>, transform_indices = @transform_2, window_bounds = array<i64: 32, 1>}, {pipeline_mode = #tpu.pipeline_mode<synchronous>, transform_indices = @transform_3, window_bounds = array<i64: 32, 32>}, {pipeline_mode = #tpu.pipeline_mode<synchronous>, transform_indices = @transform_4, window_bounds = array<i64: 32, 1>}, {pipeline_mode = #tpu.pipeline_mode<synchronous>, transform_indices = @transform_5, window_bounds = array<i64: 32, 32>}, {pipeline_mode = #tpu.pipeline_mode<synchronous>, transform_indices = @transform_6, window_bounds = array<i64: 32, 1>}, {pipeline_mode = #tpu.pipeline_mode<synchronous>, transform_indices = @transform_7, window_bounds = array<i64: 3, 32>}, {pipeline_mode = #tpu.pipeline_mode<synchronous>, transform_indices = @transform_8, window_bounds = array<i64: 3, 1>}, {transform_indices = @transform_9, window_bounds = array<i64: 3, 128>}]} {
    %c0 = arith.constant 0 : index
    %c0_0 = arith.constant 0 : index
    %0 = vector.load %arg1[%c0, %c0_0] : memref<3x128xf32, #tpu.memory_space<vmem>>, vector<3x128xf32>
    %c0_1 = arith.constant 0 : index
    %c0_2 = arith.constant 0 : index
    %1 = vector.load %arg2[%c0_1, %c0_2] : memref<32x3xf32, #tpu.memory_space<vmem>>, vector<32x3xf32>
    %c0_3 = arith.constant 0 : index
    %c0_4 = arith.constant 0 : index
    %2 = vector.load %arg3[%c0_3, %c0_4] : memref<32x1xf32, #tpu.memory_space<vmem>>, vector<32x1xf32>
    %3 = vector.extract_strided_slice %1 {offsets = [0, 0], sizes = [32, 1], strides = [1, 1]} : vector<32x3xf32> to vector<32x1xf32>
    %4 = vector.extract_strided_slice %0 {offsets = [0, 0], sizes = [1, 128], strides = [1, 1]} : vector<3x128xf32> to vector<1x128xf32>
    %5 = vector.broadcast %3 : vector<32x1xf32> to vector<32x128xf32>
    %6 = vector.broadcast %4 : vector<1x128xf32> to vector<32x128xf32>
    %7 = arith.mulf %5, %6 : vector<32x128xf32>
    %8 = vector.broadcast %2 : vector<32x1xf32> to vector<32x128xf32>
    %9 = arith.addf %8, %7 : vector<32x128xf32>
    %10 = vector.extract_strided_slice %1 {offsets = [0, 1], sizes = [32, 1], strides = [1, 1]} : vector<32x3xf32> to vector<32x1xf32>
    %11 = vector.extract_strided_slice %0 {offsets = [1, 0], sizes = [1, 128], strides = [1, 1]} : vector<3x128xf32> to vector<1x128xf32>
    %12 = vector.broadcast %10 : vector<32x1xf32> to vector<32x128xf32>
    %13 = vector.broadcast %11 : vector<1x128xf32> to vector<32x128xf32>
    %14 = arith.mulf %12, %13 : vector<32x128xf32>
    %15 = arith.addf %9, %14 : vector<32x128xf32>
    %16 = vector.extract_strided_slice %1 {offsets = [0, 2], sizes = [32, 1], strides = [1, 1]} : vector<32x3xf32> to vector<32x1xf32>
    %17 = vector.extract_strided_slice %0 {offsets = [2, 0], sizes = [1, 128], strides = [1, 1]} : vector<3x128xf32> to vector<1x128xf32>
    %18 = vector.broadcast %16 : vector<32x1xf32> to vector<32x128xf32>
    %19 = vector.broadcast %17 : vector<1x128xf32> to vector<32x128xf32>
    %20 = arith.mulf %18, %19 : vector<32x128xf32>
    %21 = arith.addf %15, %20 : vector<32x128xf32>
    %22 = math.tanh %21 : vector<32x128xf32>
    %c0_5 = arith.constant 0 : index
    %c0_6 = arith.constant 0 : index
    %23 = vector.load %arg4[%c0_5, %c0_6] : memref<32x32xf32, #tpu.memory_space<vmem>>, vector<32x32xf32>
    %c0_7 = arith.constant 0 : index
    %c0_8 = arith.constant 0 : index
    %24 = vector.load %arg5[%c0_7, %c0_8] : memref<32x1xf32, #tpu.memory_space<vmem>>, vector<32x1xf32>
    %cst = arith.constant dense<0.000000e+00> : vector<32x128xf32>
    %25 = tpu.matmul %23, %22, %cst {dimension_numbers = #tpu.dot_dimension_numbers<[1], [0], [0], [1], [0, 0, 1, 1], [], []>} : vector<32x32xf32>, vector<32x128xf32>, vector<32x128xf32> -> vector<32x128xf32>
    %26 = vector.broadcast %24 : vector<32x1xf32> to vector<32x128xf32>
    %27 = arith.addf %25, %26 : vector<32x128xf32>
    %28 = math.tanh %27 : vector<32x128xf32>
    %c0_9 = arith.constant 0 : index
    %c0_10 = arith.constant 0 : index
    %29 = vector.load %arg6[%c0_9, %c0_10] : memref<32x32xf32, #tpu.memory_space<vmem>>, vector<32x32xf32>
    %c0_11 = arith.constant 0 : index
    %c0_12 = arith.constant 0 : index
    %30 = vector.load %arg7[%c0_11, %c0_12] : memref<32x1xf32, #tpu.memory_space<vmem>>, vector<32x1xf32>
    %cst_13 = arith.constant dense<0.000000e+00> : vector<32x128xf32>
    %31 = tpu.matmul %29, %28, %cst_13 {dimension_numbers = #tpu.dot_dimension_numbers<[1], [0], [0], [1], [0, 0, 1, 1], [], []>} : vector<32x32xf32>, vector<32x128xf32>, vector<32x128xf32> -> vector<32x128xf32>
    %32 = vector.broadcast %30 : vector<32x1xf32> to vector<32x128xf32>
    %33 = arith.addf %31, %32 : vector<32x128xf32>
    %34 = math.tanh %33 : vector<32x128xf32>
    %c0_14 = arith.constant 0 : index
    %c0_15 = arith.constant 0 : index
    %35 = vector.load %arg8[%c0_14, %c0_15] : memref<3x32xf32, #tpu.memory_space<vmem>>, vector<3x32xf32>
    %c0_16 = arith.constant 0 : index
    %c0_17 = arith.constant 0 : index
    %36 = vector.load %arg9[%c0_16, %c0_17] : memref<3x1xf32, #tpu.memory_space<vmem>>, vector<3x1xf32>
    %cst_18 = arith.constant dense<0.000000e+00> : vector<3x128xf32>
    %37 = tpu.matmul %35, %34, %cst_18 {dimension_numbers = #tpu.dot_dimension_numbers<[1], [0], [0], [1], [0, 0, 1, 1], [], []>} : vector<3x32xf32>, vector<32x128xf32>, vector<3x128xf32> -> vector<3x128xf32>
    %38 = vector.broadcast %36 : vector<3x1xf32> to vector<3x128xf32>
    %39 = arith.addf %37, %38 : vector<3x128xf32>
    %c0_19 = arith.constant 0 : index
    %c0_20 = arith.constant 0 : index
    %40 = vector.load %arg10[%c0_19, %c0_20] : memref<3x128xf32, #tpu.memory_space<vmem>>, vector<3x128xf32>
    tpu.vector_store %arg10[%c0_19, %c0_20], %39 {strides = array<i32>} : memref<3x128xf32, #tpu.memory_space<vmem>>, vector<3x128xf32>,
    return
  }
  func.func @transform_0(%arg0: i32) -> (i32, i32) {
    %c0_i32 = arith.constant 0 : i32
    %c0_i32_0 = arith.constant 0 : i32
    return %c0_i32, %arg0 : i32, i32
  }
  func.func @transform_1(%arg0: i32) -> (i32, i32) {
    %c0_i32 = arith.constant 0 : i32
    %c0_i32_0 = arith.constant 0 : i32
    %c0_i32_1 = arith.constant 0 : i32
    return %c0_i32, %c0_i32_0 : i32, i32
  }
  func.func @transform_2(%arg0: i32) -> (i32, i32) {
    %c0_i32 = arith.constant 0 : i32
    %c0_i32_0 = arith.constant 0 : i32
    %c0_i32_1 = arith.constant 0 : i32
    return %c0_i32, %c0_i32_0 : i32, i32
  }
  func.func @transform_3(%arg0: i32) -> (i32, i32) {
    %c0_i32 = arith.constant 0 : i32
    %c0_i32_0 = arith.constant 0 : i32
    %c0_i32_1 = arith.constant 0 : i32
    return %c0_i32, %c0_i32_0 : i32, i32
  }
  func.func @transform_4(%arg0: i32) -> (i32, i32) {
    %c0_i32 = arith.constant 0 : i32
    %c0_i32_0 = arith.constant 0 : i32
    %c0_i32_1 = arith.constant 0 : i32
    return %c0_i32, %c0_i32_0 : i32, i32
  }
  func.func @transform_5(%arg0: i32) -> (i32, i32) {
    %c0_i32 = arith.constant 0 : i32
    %c0_i32_0 = arith.constant 0 : i32
    %c0_i32_1 = arith.constant 0 : i32
    return %c0_i32, %c0_i32_0 : i32, i32
  }
  func.func @transform_6(%arg0: i32) -> (i32, i32) {
    %c0_i32 = arith.constant 0 : i32
    %c0_i32_0 = arith.constant 0 : i32
    %c0_i32_1 = arith.constant 0 : i32
    return %c0_i32, %c0_i32_0 : i32, i32
  }
  func.func @transform_7(%arg0: i32) -> (i32, i32) {
    %c0_i32 = arith.constant 0 : i32
    %c0_i32_0 = arith.constant 0 : i32
    %c0_i32_1 = arith.constant 0 : i32
    return %c0_i32, %c0_i32_0 : i32, i32
  }
  func.func @transform_8(%arg0: i32) -> (i32, i32) {
    %c0_i32 = arith.constant 0 : i32
    %c0_i32_0 = arith.constant 0 : i32
    %c0_i32_1 = arith.constant 0 : i32
    return %c0_i32, %c0_i32_0 : i32, i32
  }
  func.func @transform_9(%arg0: i32) -> (i32, i32) {
    %c0_i32 = arith.constant 0 : i32
    %c0_i32_0 = arith.constant 0 : i32
    return %c0_i32, %arg0 : i32, i32
  }
}

</mosaic_0001>

<llo_original>
// kernel: tpu_custom_call.1
$region0: #{tpu_custom_call.1}
  #allocation0 [shape = 'u32[]', space=smem, size = 0x4, offset = 0x4, fixed_abs, tag = 'smem constant byte address 0x4 - core index']
  #allocation1 [shape = 'u32[72,128]{1,0:T(1,128)}', space=vmem, size = 0x9000, scoped, tag = 'internal scratch']
  %s0 = inlined_call_operand.vmem [shape: f32[3,256], index: 0, kind: input, shape index: {}]
  %s1 = inlined_call_operand.vmem [shape: f32[32,3], index: 1, kind: input, shape index: {}]
  %s2 = inlined_call_operand.vmem [shape: f32[32,1], index: 2, kind: input, shape index: {}]
  %s3 = inlined_call_operand.vmem [shape: f32[32,32], index: 3, kind: input, shape index: {}]
  %s4 = inlined_call_operand.vmem [shape: f32[32,1], index: 4, kind: input, shape index: {}]
  %s5 = inlined_call_operand.vmem [shape: f32[32,32], index: 5, kind: input, shape index: {}]
  %s6 = inlined_call_operand.vmem [shape: f32[32,1], index: 6, kind: input, shape index: {}]
  %s7 = inlined_call_operand.vmem [shape: f32[3,32], index: 7, kind: input, shape index: {}]
  %s8 = inlined_call_operand.vmem [shape: f32[3,1], index: 8, kind: input, shape index: {}]
  %s9 = inlined_call_operand.hbm [shape: f32[3,256], index: 9, kind: output, shape index: {}]
  %s10 = sld [smem:[#allocation0]]
  $region69: #{tpu_custom_call.1} parent=0
    _
  %s12 = ssub.s32 1, %s10
  %s13 = scalar_select 0, %s12, %s10
  $region1: #{tpu_custom_call.1} parent=0
    #allocation2 [shape = 'u8[4096]{0}', space=vmem, size = 0x1000, scoped, tag = 'output window, operand 0']
    #allocation3 [shape = 's32[2]{0}', space=sflag, size = 0x8, scoped, tag = 'scoped memory for tpu_custom_call.1']
    %14 = vsyncpa [#allocation3], 0
    %s15 = scalar_lea.sflag [#allocation3], 1
    %16 = vsyncpa %s15, 0
    loop: start=0, step=1, limit=4
    $region2: #{tpu_custom_call.1} parent=1 // loop_pre_header
      _
    $region3: #{tpu_custom_call.1} parent=1 // loop_header
      %s18 = sphi 0, %s22
      %p19 = scmp.ge.s32.totalorder %s18, 4
      %s28 = sphi 0, %s30
      %s31 = sphi 0, %s28
      %s32 = sphi 0, %s31
      %s48 = sphi 0, %s32
      %s52 = sphi 0, %s52
      %s54 = sphi 0, %s52
      %s55 = sphi 0, %s54
      %s69 = sphi 0, %s55
      %s73 = sphi 0, %s73
      %s75 = sphi 0, %s73
      %s76 = sphi 0, %s75
      %s90 = sphi 0, %s76
      %s94 = sphi 0, %s94
      %s96 = sphi 0, %s94
      %s97 = sphi 0, %s96
      %s111 = sphi 0, %s97
      %s115 = sphi 0, %s115
      %s117 = sphi 0, %s115
      %s118 = sphi 0, %s117
      %s132 = sphi 0, %s118
      %s136 = sphi 0, %s136
      %s138 = sphi 0, %s136
      %s139 = sphi 0, %s138
      %s153 = sphi 0, %s139
      %s157 = sphi 0, %s157
      %s159 = sphi 0, %s157
      %s160 = sphi 0, %s159
      %s174 = sphi 0, %s160
      %s178 = sphi 0, %s178
      %s180 = sphi 0, %s178
      %s181 = sphi 0, %s180
      %s195 = sphi 0, %s181
      %s199 = sphi 0, %s199
      %s201 = sphi 0, %s199
      %s202 = sphi 0, %s201
      %s216 = sphi 0, %s202
      %s222 = sphi 0, %s224
      %s225 = sphi 0, %s222
      %s226 = sphi 0, %s225
      %s242 = sphi 0, %s226
    $region4: #{tpu_custom_call.1} parent=1 // loop_header_branch
      %21 = sbr.rel (%p19) target = $region8
    $region5: #{tpu_custom_call.1} parent=1 // loop_body
      %s23 = ssub.s32 %s18, 1
      %s24 = ssub.s32 %s18, 2
      %s25 = sadd.s32 %s18, 1
      %s26 = ssub.s32 %s18, %s25
      %p27 = scmp.eq.s32.totalorder %s26, 0
      %s29 = sadd.s32 %s28, 1
      %s30 = scalar_select %p27, %s28, %s29
      %p33 = pneg %p27
      %p34 = scmp.eq.s32.totalorder %s18, 1
      %p35 = por %p33, %p34
      %p36 = scmp.ne.s32.totalorder %s28, %s31
      %p37 = scmp.eq.s32.totalorder %s18, 0
      %p38 = por %p36, %p37
      %p39 = scmp.ne.s32.totalorder %s28, %s31
      %p40 = scmp.eq.s32.totalorder %s23, 1
      %p41 = por %p39, %p40
      %p42 = scmp.ne.s32.totalorder %s31, %s32
      %p43 = scmp.eq.s32.totalorder %s23, 0
      %p44 = por %p42, %p43
      %p45 = scmp.ne.s32.totalorder %s31, %s32
      %p46 = scmp.eq.s32.totalorder %s24, 1
      %p47 = por %p45, %p46
      %p49 = scmp.ne.s32.totalorder %s32, %s48
      %p50 = scmp.eq.s32.totalorder %s24, 0
      %p51 = por %p49, %p50
      %s53 = sadd.s32 %s52, 1
      %p56 = scmp.eq.s32.totalorder %s18, 1
      %p57 = scmp.ne.s32.totalorder %s52, %s54
      %p58 = scmp.eq.s32.totalorder %s18, 0
      %p59 = por %p57, %p58
      %p60 = scmp.ne.s32.totalorder %s52, %s54
      %p61 = scmp.eq.s32.totalorder %s23, 1
      %p62 = por %p60, %p61
      %p63 = scmp.ne.s32.totalorder %s54, %s55
      %p64 = scmp.eq.s32.totalorder %s23, 0
      %p65 = por %p63, %p64
      %p66 = scmp.ne.s32.totalorder %s54, %s55
      %p67 = scmp.eq.s32.totalorder %s24, 1
      %p68 = por %p66, %p67
      %p70 = scmp.ne.s32.totalorder %s55, %s69
      %p71 = scmp.eq.s32.totalorder %s24, 0
      %p72 = por %p70, %p71
      %s74 = sadd.s32 %s73, 1
      %p77 = scmp.eq.s32.totalorder %s18, 1
      %p78 = scmp.ne.s32.totalorder %s73, %s75
      %p79 = scmp.eq.s32.totalorder %s18, 0
      %p80 = por %p78, %p79
      %p81 = scmp.ne.s32.totalorder %s73, %s75
      %p82 = scmp.eq.s32.totalorder %s23, 1
      %p83 = por %p81, %p82
      %p84 = scmp.ne.s32.totalorder %s75, %s76
      %p85 = scmp.eq.s32.totalorder %s23, 0
      %p86 = por %p84, %p85
      %p87 = scmp.ne.s32.totalorder %s75, %s76
      %p88 = scmp.eq.s32.totalorder %s24, 1
      %p89 = por %p87, %p88
      %p91 = scmp.ne.s32.totalorder %s76, %s90
      %p92 = scmp.eq.s32.totalorder %s24, 0
      %p93 = por %p91, %p92
      %s95 = sadd.s32 %s94, 1
      %p98 = scmp.eq.s32.totalorder %s18, 1
      %p99 = scmp.ne.s32.totalorder %s94, %s96
      %p100 = scmp.eq.s32.totalorder %s18, 0
      %p101 = por %p99, %p100
      %p102 = scmp.ne.s32.totalorder %s94, %s96
      %p103 = scmp.eq.s32.totalorder %s23, 1
      %p104 = por %p102, %p103
      %p105 = scmp.ne.s32.totalorder %s96, %s97
      %p106 = scmp.eq.s32.totalorder %s23, 0
      %p107 = por %p105, %p106
      %p108 = scmp.ne.s32.totalorder %s96, %s97
      %p109 = scmp.eq.s32.totalorder %s24, 1
      %p110 = por %p108, %p109
      %p112 = scmp.ne.s32.totalorder %s97, %s111
      %p113 = scmp.eq.s32.totalorder %s24, 0
      %p114 = por %p112, %p113
      %s116 = sadd.s32 %s115, 1
      %p119 = scmp.eq.s32.totalorder %s18, 1
      %p120 = scmp.ne.s32.totalorder %s115, %s117
      %p121 = scmp.eq.s32.totalorder %s18, 0
      %p122 = por %p120, %p121
      %p123 = scmp.ne.s32.totalorder %s115, %s117
      %p124 = scmp.eq.s32.totalorder %s23, 1
      %p125 = por %p123, %p124
      %p126 = scmp.ne.s32.totalorder %s117, %s118
      %p127 = scmp.eq.s32.totalorder %s23, 0
      %p128 = por %p126, %p127
      %p129 = scmp.ne.s32.totalorder %s117, %s118
      %p130 = scmp.eq.s32.totalorder %s24, 1
      %p131 = por %p129, %p130
      %p133 = scmp.ne.s32.totalorder %s118, %s132
      %p134 = scmp.eq.s32.totalorder %s24, 0
      %p135 = por %p133, %p134
      %s137 = sadd.s32 %s136, 1
      %p140 = scmp.eq.s32.totalorder %s18, 1
      %p141 = scmp.ne.s32.totalorder %s136, %s138
      %p142 = scmp.eq.s32.totalorder %s18, 0
      %p143 = por %p141, %p142
      %p144 = scmp.ne.s32.totalorder %s136, %s138
      %p145 = scmp.eq.s32.totalorder %s23, 1
      %p146 = por %p144, %p145
      %p147 = scmp.ne.s32.totalorder %s138, %s139
      %p148 = scmp.eq.s32.totalorder %s23, 0
      %p149 = por %p147, %p148
      %p150 = scmp.ne.s32.totalorder %s138, %s139
      %p151 = scmp.eq.s32.totalorder %s24, 1
      %p152 = por %p150, %p151
      %p154 = scmp.ne.s32.totalorder %s139, %s153
      %p155 = scmp.eq.s32.totalorder %s24, 0
      %p156 = por %p154, %p155
      %s158 = sadd.s32 %s157, 1
      %p161 = scmp.eq.s32.totalorder %s18, 1
      %p162 = scmp.ne.s32.totalorder %s157, %s159
      %p163 = scmp.eq.s32.totalorder %s18, 0
      %p164 = por %p162, %p163
      %p165 = scmp.ne.s32.totalorder %s157, %s159
      %p166 = scmp.eq.s32.totalorder %s23, 1
      %p167 = por %p165, %p166
      %p168 = scmp.ne.s32.totalorder %s159, %s160
      %p169 = scmp.eq.s32.totalorder %s23, 0
      %p170 = por %p168, %p169
      %p171 = scmp.ne.s32.totalorder %s159, %s160
      %p172 = scmp.eq.s32.totalorder %s24, 1
      %p173 = por %p171, %p172
      %p175 = scmp.ne.s32.totalorder %s160, %s174
      %p176 = scmp.eq.s32.totalorder %s24, 0
      %p177 = por %p175, %p176
      %s179 = sadd.s32 %s178, 1
      %p182 = scmp.eq.s32.totalorder %s18, 1
      %p183 = scmp.ne.s32.totalorder %s178, %s180
      %p184 = scmp.eq.s32.totalorder %s18, 0
      %p185 = por %p183, %p184
      %p186 = scmp.ne.s32.totalorder %s178, %s180
      %p187 = scmp.eq.s32.totalorder %s23, 1
      %p188 = por %p186, %p187
      %p189 = scmp.ne.s32.totalorder %s180, %s181
      %p190 = scmp.eq.s32.totalorder %s23, 0
      %p191 = por %p189, %p190
      %p192 = scmp.ne.s32.totalorder %s180, %s181
      %p193 = scmp.eq.s32.totalorder %s24, 1
      %p194 = por %p192, %p193
      %p196 = scmp.ne.s32.totalorder %s181, %s195
      %p197 = scmp.eq.s32.totalorder %s24, 0
      %p198 = por %p196, %p197
      %s200 = sadd.s32 %s199, 1
      %p203 = scmp.eq.s32.totalorder %s18, 1
      %p204 = scmp.ne.s32.totalorder %s199, %s201
      %p205 = scmp.eq.s32.totalorder %s18, 0
      %p206 = por %p204, %p205
      %p207 = scmp.ne.s32.totalorder %s199, %s201
      %p208 = scmp.eq.s32.totalorder %s23, 1
      %p209 = por %p207, %p208
      %p210 = scmp.ne.s32.totalorder %s201, %s202
      %p211 = scmp.eq.s32.totalorder %s23, 0
      %p212 = por %p210, %p211
      %p213 = scmp.ne.s32.totalorder %s201, %s202
      %p214 = scmp.eq.s32.totalorder %s24, 1
      %p215 = por %p213, %p214
      %p217 = scmp.ne.s32.totalorder %s202, %s216
      %p218 = scmp.eq.s32.totalorder %s24, 0
      %p219 = por %p217, %p218
      %s220 = ssub.s32 %s18, %s25
      %p221 = scmp.eq.s32.totalorder %s220, 0
      %s223 = sadd.s32 %s222, 1
      %s224 = scalar_select %p221, %s222, %s223
      %p227 = pneg %p221
      %p228 = scmp.eq.s32.totalorder %s18, 1
      %p229 = por %p227, %p228
      %p230 = scmp.ne.s32.totalorder %s222, %s225
      %p231 = scmp.eq.s32.totalorder %s18, 0
      %p232 = por %p230, %p231
      %p233 = scmp.ne.s32.totalorder %s222, %s225
      %p234 = scmp.eq.s32.totalorder %s23, 1
      %p235 = por %p233, %p234
      %p236 = scmp.ne.s32.totalorder %s225, %s226
      %p237 = scmp.eq.s32.totalorder %s23, 0
      %p238 = por %p236, %p237
      %p239 = scmp.ne.s32.totalorder %s225, %s226
      %p240 = scmp.eq.s32.totalorder %s24, 1
      %p241 = por %p239, %p240
      %p243 = scmp.ne.s32.totalorder %s226, %s242
      %p244 = scmp.eq.s32.totalorder %s24, 0
      %p245 = por %p243, %p244
      %p246 = scmp.le.s32.totalorder 1, %s18
      %p247 = scmp.lt.s32.totalorder %s18, 3
      %p248 = pnand %p246, %p247
      %p249 = pneg %p248
      // Predicated region
      $region9: #{tpu_custom_call.1} parent=5 // pred_check
        _
      $region10: #{tpu_custom_call.1} parent=5 // pred_check_branch
        %251 = sbr.rel (%p248) target = $region12
      $region11: #{tpu_custom_call.1} parent=5 // pred_region
        %s252 = ssub.s32 %s18, 1
        // Predicated region
        $region13: #{tpu_custom_call.1} parent=11 // pred_check
          %p253 = pneg %p65
        $region14: #{tpu_custom_call.1} parent=11 // pred_check_branch
          %255 = sbr.rel (%p253) target = $region16
        $region15: #{tpu_custom_call.1} parent=11 // pred_region
          _
        $region16: #{tpu_custom_call.1} parent=11 // pred_fallthru
          _
        // Predicated region
        $region17: #{tpu_custom_call.1} parent=11 // pred_check
          %p256 = pneg %p86
        $region18: #{tpu_custom_call.1} parent=11 // pred_check_branch
          %258 = sbr.rel (%p256) target = $region20
        $region19: #{tpu_custom_call.1} parent=11 // pred_region
          _
        $region20: #{tpu_custom_call.1} parent=11 // pred_fallthru
          _
        // Predicated region
        $region21: #{tpu_custom_call.1} parent=11 // pred_check
          %p259 = pneg %p107
        $region22: #{tpu_custom_call.1} parent=11 // pred_check_branch
          %261 = sbr.rel (%p259) target = $region24
        $region23: #{tpu_custom_call.1} parent=11 // pred_region
          _
        $region24: #{tpu_custom_call.1} parent=11 // pred_fallthru
          _
        // Predicated region
        $region25: #{tpu_custom_call.1} parent=11 // pred_check
          %p262 = pneg %p128
        $region26: #{tpu_custom_call.1} parent=11 // pred_check_branch
          %264 = sbr.rel (%p262) target = $region28
        $region27: #{tpu_custom_call.1} parent=11 // pred_region
          _
        $region28: #{tpu_custom_call.1} parent=11 // pred_fallthru
          _
        // Predicated region
        $region29: #{tpu_custom_call.1} parent=11 // pred_check
          %p265 = pneg %p149
        $region30: #{tpu_custom_call.1} parent=11 // pred_check_branch
          %267 = sbr.rel (%p265) target = $region32
        $region31: #{tpu_custom_call.1} parent=11 // pred_region
          _
        $region32: #{tpu_custom_call.1} parent=11 // pred_fallthru
          _
        // Predicated region
        $region33: #{tpu_custom_call.1} parent=11 // pred_check
          %p268 = pneg %p170
        $region34: #{tpu_custom_call.1} parent=11 // pred_check_branch
          %270 = sbr.rel (%p268) target = $region36
        $region35: #{tpu_custom_call.1} parent=11 // pred_region
          _
        $region36: #{tpu_custom_call.1} parent=11 // pred_fallthru
          _
        // Predicated region
        $region37: #{tpu_custom_call.1} parent=11 // pred_check
          %p271 = pneg %p191
        $region38: #{tpu_custom_call.1} parent=11 // pred_check_branch
          %273 = sbr.rel (%p271) target = $region40
        $region39: #{tpu_custom_call.1} parent=11 // pred_region
          _
        $region40: #{tpu_custom_call.1} parent=11 // pred_fallthru
          _
        // Predicated region
        $region41: #{tpu_custom_call.1} parent=11 // pred_check
          %p274 = pneg %p212
        $region42: #{tpu_custom_call.1} parent=11 // pred_check_branch
          %276 = sbr.rel (%p274) target = $region44
        $region43: #{tpu_custom_call.1} parent=11 // pred_region
          _
        $region44: #{tpu_custom_call.1} parent=11 // pred_fallthru
          _
      $region12: #{tpu_custom_call.1} parent=5 // pred_fallthru
        _
      %p277 = scmp.lt.s32.totalorder %s18, 2
      // Predicated region
      $region45: #{tpu_custom_call.1} parent=5 // pred_check
        %p278 = pneg %p277
      $region46: #{tpu_custom_call.1} parent=5 // pred_check_branch
        %280 = sbr.rel (%p278) target = $region48
      $region47: #{tpu_custom_call.1} parent=5 // pred_region
        // Predicated region
        $region49: #{tpu_custom_call.1} parent=47 // pred_check
          %p281 = pneg %p38
        $region50: #{tpu_custom_call.1} parent=47 // pred_check_branch
          %283 = sbr.rel (%p281) target = $region52
        $region51: #{tpu_custom_call.1} parent=47 // pred_region
          %p284 = scmp.lt.s32.totalorder %s18, 1
          %s285 = scalar_select %p284, %s18, 1
          %s286 = smul.addr %s285, 4
          %s287 = scalar_lea.vmem %s0, %s286
        $region52: #{tpu_custom_call.1} parent=47 // pred_fallthru
          _
      $region48: #{tpu_custom_call.1} parent=5 // pred_fallthru
        _
      %p288 = scmp.le.s32.totalorder 1, %s18
      %p289 = scmp.lt.s32.totalorder %s18, 3
      %p290 = pnand %p288, %p289
      %p291 = pneg %p290
      // Predicated region
      $region53: #{tpu_custom_call.1} parent=5 // pred_check
        _
      $region54: #{tpu_custom_call.1} parent=5 // pred_check_branch
        %293 = sbr.rel (%p290) target = $region56
      $region55: #{tpu_custom_call.1} parent=5 // pred_region
        %s294 = ssub.s32 %s18, 1
        %p295 = scmp.lt.s32.totalorder %s23, 1
        %s296 = scalar_select %p295, %s23, 1
        %s297 = smul.addr %s296, 4
        %s298 = scalar_lea.vmem %s0, %s297
        %p299 = pneg %p44
        %p300 = pneg %p41
        %p301 = pneg %p65
        %p302 = pneg %p62
        %p303 = pneg %p86
        %p304 = pneg %p83
        %p305 = pneg %p107
        %p306 = pneg %p104
        %p307 = pneg %p128
        %p308 = pneg %p125
        %p309 = pneg %p149
        %p310 = pneg %p146
        %p311 = pneg %p170
        %p312 = pneg %p167
        %p313 = pneg %p191
        %p314 = pneg %p188
        %p315 = pneg %p212
        %p316 = pneg %p209
        %p317 = pneg %p238
        %p318 = pneg %p235
        %s319 = sand.u32 %s225, 1
        %s320 = scalar_lea.sflag [#allocation3], %s319
        %s321 = sand.u32 %s225, 1
        %s322 = smul.addr %s321, 4
        %s323 = scalar_lea.vmem [#allocation2], %s322
        %p324 = scmp.lt.s32.totalorder %s23, 1
        %s325 = scalar_select %p324, %s23, 1
        %s326 = smul.addr %s325, 4
        %s327 = scalar_lea.vmem %s0, %s326
        %v328 = vld [vmem:[%s327] sm:$0x7]
        %v329 = vld [vmem:[%s1] sm:$0xff]
        %v330 = vld [vmem:[%s1 + $0x8] sm:$0xff]
        %v331 = vld [vmem:[%s1 + $0x10] sm:$0xff]
        %v332 = vld [vmem:[%s1 + $0x18] sm:$0xff]
        %v333 = vld [vmem:[%s2] sm:$0xff]
        %v334 = vld [vmem:[%s2 + $0x8] sm:$0xff]
        %v335 = vld [vmem:[%s2 + $0x10] sm:$0xff]
        %v336 = vld [vmem:[%s2 + $0x18] sm:$0xff]
        %338 = vset.pattern.permute.xlu0 0
        %339 = vperm.xlu0 %338, %v329
        %v340 = vpop.permute.xlu0 %339
        %343 = vset.pattern.permute.xlu0 0
        %344 = vperm.xlu0 %343, %v330
        %v345 = vpop.permute.xlu0 %344
        %348 = vset.pattern.permute.xlu0 0
        %349 = vperm.xlu0 %348, %v331
        %v350 = vpop.permute.xlu0 %349
        %353 = vset.pattern.permute.xlu0 0
        %354 = vperm.xlu0 %353, %v332
        %v355 = vpop.permute.xlu0 %354
        %v357 = vperm.slane %v328, 0
        %v358 = vmul.f32 %v340, %v357
        %v359 = vmul.f32 %v345, %v357
        %v360 = vmul.f32 %v350, %v357
        %v361 = vmul.f32 %v355, %v357
        %363 = vset.pattern.permute.xlu0 0
        %364 = vperm.xlu0 %363, %v333
        %v365 = vpop.permute.xlu0 %364
        %368 = vset.pattern.permute.xlu0 0
        %369 = vperm.xlu0 %368, %v334
        %v370 = vpop.permute.xlu0 %369
        %373 = vset.pattern.permute.xlu0 0
        %374 = vperm.xlu0 %373, %v335
        %v375 = vpop.permute.xlu0 %374
        %378 = vset.pattern.permute.xlu0 0
        %379 = vperm.xlu0 %378, %v336
        %v380 = vpop.permute.xlu0 %379
        %v382 = vadd.f32 %v365, %v358
        %v383 = vadd.f32 %v370, %v359
        %v384 = vadd.f32 %v375, %v360
        %v385 = vadd.f32 %v380, %v361
        %386 = vset.pattern.permute.xlu0 1
        %387 = vperm.xlu0 %386, %v329
        %v388 = vpop.permute.xlu0 %387
        %390 = vset.pattern.permute.xlu0 1
        %391 = vperm.xlu0 %390, %v330
        %v392 = vpop.permute.xlu0 %391
        %394 = vset.pattern.permute.xlu0 1
        %395 = vperm.xlu0 %394, %v331
        %v396 = vpop.permute.xlu0 %395
        %398 = vset.pattern.permute.xlu0 1
        %399 = vperm.xlu0 %398, %v332
        %v400 = vpop.permute.xlu0 %399
        %v402 = vperm.slane %v328, 1
        %v403 = vmul.f32 %v388, %v402
        %v404 = vmul.f32 %v392, %v402
        %v405 = vmul.f32 %v396, %v402
        %v406 = vmul.f32 %v400, %v402
        %v407 = vadd.f32 %v382, %v403
        %v408 = vadd.f32 %v383, %v404
        %v409 = vadd.f32 %v384, %v405
        %v410 = vadd.f32 %v385, %v406
        %411 = vset.pattern.permute.xlu0 2
        %412 = vperm.xlu0 %411, %v329
        %v413 = vpop.permute.xlu0 %412
        %415 = vset.pattern.permute.xlu0 2
        %416 = vperm.xlu0 %415, %v330
        %v417 = vpop.permute.xlu0 %416
        %419 = vset.pattern.permute.xlu0 2
        %420 = vperm.xlu0 %419, %v331
        %v421 = vpop.permute.xlu0 %420
        %423 = vset.pattern.permute.xlu0 2
        %424 = vperm.xlu0 %423, %v332
        %v425 = vpop.permute.xlu0 %424
        %v427 = vperm.slane %v328, 2
        %v428 = vmul.f32 %v413, %v427
        %v429 = vmul.f32 %v417, %v427
        %v430 = vmul.f32 %v421, %v427
        %v431 = vmul.f32 %v425, %v427
        %v432 = vadd.f32 %v407, %v428
        %v433 = vadd.f32 %v408, %v429
        %v434 = vadd.f32 %v409, %v430
        %v435 = vadd.f32 %v410, %v431
        %v436 = vtanh.pop %v432
        %v437 = vtanh.pop %v433
        %v438 = vtanh.pop %v434
        %v439 = vtanh.pop %v435
        %v440 = vld [vmem:[%s3] sm:$0xff]
        %v441 = vld [vmem:[%s3 + $0x8] sm:$0xff]
        %v442 = vld [vmem:[%s3 + $0x10] sm:$0xff]
        %v443 = vld [vmem:[%s3 + $0x18] sm:$0xff]
        %v444 = vld [vmem:[%s4] sm:$0xff]
        %v445 = vld [vmem:[%s4 + $0x8] sm:$0xff]
        %v446 = vld [vmem:[%s4 + $0x10] sm:$0xff]
        %v447 = vld [vmem:[%s4 + $0x18] sm:$0xff]
        %449 = vset.pattern.permute.xlu0 0
        %450 = vperm.xlu0 %449, %v444
        %v451 = vpop.permute.xlu0 %450
        %454 = vset.pattern.permute.xlu0 0
        %455 = vperm.xlu0 %454, %v445
        %v456 = vpop.permute.xlu0 %455
        %459 = vset.pattern.permute.xlu0 0
        %460 = vperm.xlu0 %459, %v446
        %v461 = vpop.permute.xlu0 %460
        %464 = vset.pattern.permute.xlu0 0
        %465 = vperm.xlu0 %464, %v447
        %v466 = vpop.permute.xlu0 %465
        %vm468 = vcmask 261120
        %v470 = vsel %vm468, %v440, 0
        %v473 = vsel %vm468, %v441, 0
        %v476 = vsel %vm468, %v442, 0
        %v479 = vsel %vm468, %v443, 0
        %481 = vmatpush.msra.mxu0 0.0
        %482 = vmatpush.msra.mxu0 0.0
        %483 = vmatpush.msra.mxu0 0.0
        %484 = vmatpush.msra.mxu0 0.0
        %485 = vmatpush.msra.mxu0 0.0
        %486 = vmatpush.msra.mxu0 0.0
        %487 = vmatpush.msra.mxu0 0.0
        %488 = vmatpush.msra.mxu0 0.0
        %489 = vmatpush.msra.mxu0 0.0
        %490 = vmatpush.msra.mxu0 0.0
        %491 = vmatpush.msra.mxu0 0.0
        %492 = vmatpush.msra.mxu0 0.0
        %493 = vmatpush.msra.mxu0 %v439
        %494 = vmatpush.msra.mxu0 %v438
        %495 = vmatpush.msra.mxu0 %v437
        %496 = vmatpush.msra.mxu0 %v436
        %497 = vmatmul.f32.gmra.mxu0 %v470
        %v498 = vpop.f32.mrf.mxu0
        %v499 = vadd.f32 %v451, %v498
        %500 = vmatmul.f32.gmra.mxu0 %v473
        %v501 = vpop.f32.mrf.mxu0
        %v502 = vadd.f32 %v456, %v501
        %503 = vmatmul.f32.gmra.mxu0 %v476
        %v504 = vpop.f32.mrf.mxu0
        %v505 = vadd.f32 %v461, %v504
        %506 = vmatmul.f32.gmra.mxu0 %v479
        %v507 = vpop.f32.mrf.mxu0
        %v508 = vadd.f32 %v466, %v507
        %509 = vdwg.mxu0
        %v510 = vtanh.pop %v499
        %v511 = vtanh.pop %v502
        %v512 = vtanh.pop %v505
        %v513 = vtanh.pop %v508
        %v514 = vld [vmem:[%s5] sm:$0xff]
        %v515 = vld [vmem:[%s5 + $0x8] sm:$0xff]
        %v516 = vld [vmem:[%s5 + $0x10] sm:$0xff]
        %v517 = vld [vmem:[%s5 + $0x18] sm:$0xff]
        %v518 = vld [vmem:[%s6] sm:$0xff]
        %v519 = vld [vmem:[%s6 + $0x8] sm:$0xff]
        %v520 = vld [vmem:[%s6 + $0x10] sm:$0xff]
        %v521 = vld [vmem:[%s6 + $0x18] sm:$0xff]
        %523 = vset.pattern.permute.xlu0 0
        %524 = vperm.xlu0 %523, %v518
        %v525 = vpop.permute.xlu0 %524
        %528 = vset.pattern.permute.xlu0 0
        %529 = vperm.xlu0 %528, %v519
        %v530 = vpop.permute.xlu0 %529
        %533 = vset.pattern.permute.xlu0 0
        %534 = vperm.xlu0 %533, %v520
        %v535 = vpop.permute.xlu0 %534
        %538 = vset.pattern.permute.xlu0 0
        %539 = vperm.xlu0 %538, %v521
        %v540 = vpop.permute.xlu0 %539
        %v543 = vsel %vm468, %v514, 0
        %v546 = vsel %vm468, %v515, 0
        %v549 = vsel %vm468, %v516, 0
        %v552 = vsel %vm468, %v517, 0
        %554 = vmatpush.msra.mxu0 0.0
        %555 = vmatpush.msra.mxu0 0.0
        %556 = vmatpush.msra.mxu0 0.0
        %557 = vmatpush.msra.mxu0 0.0
        %558 = vmatpush.msra.mxu0 0.0
        %559 = vmatpush.msra.mxu0 0.0
        %560 = vmatpush.msra.mxu0 0.0
        %561 = vmatpush.msra.mxu0 0.0
        %562 = vmatpush.msra.mxu0 0.0
        %563 = vmatpush.msra.mxu0 0.0
        %564 = vmatpush.msra.mxu0 0.0
        %565 = vmatpush.msra.mxu0 0.0
        %566 = vmatpush.msra.mxu0 %v513
        %567 = vmatpush.msra.mxu0 %v512
        %568 = vmatpush.msra.mxu0 %v511
        %569 = vmatpush.msra.mxu0 %v510
        %570 = vmatmul.f32.gmra.mxu0 %v543
        %v571 = vpop.f32.mrf.mxu0
        %v572 = vadd.f32 %v525, %v571
        %573 = vmatmul.f32.gmra.mxu0 %v546
        %v574 = vpop.f32.mrf.mxu0
        %v575 = vadd.f32 %v530, %v574
        %576 = vmatmul.f32.gmra.mxu0 %v549
        %v577 = vpop.f32.mrf.mxu0
        %v578 = vadd.f32 %v535, %v577
        %579 = vmatmul.f32.gmra.mxu0 %v552
        %v580 = vpop.f32.mrf.mxu0
        %v581 = vadd.f32 %v540, %v580
        %582 = vdwg.mxu0
        %v583 = vtanh.pop %v572
        %v584 = vtanh.pop %v575
        %v585 = vtanh.pop %v578
        %v586 = vtanh.pop %v581
        %v587 = vld [vmem:[%s7] sm:$0x7]
        %v588 = vld [vmem:[%s8] sm:$0x7]
        %590 = vset.pattern.permute.xlu0 0
        %591 = vperm.xlu0 %590, %v588
        %v592 = vpop.permute.xlu0 %591
        %v595 = vsel %vm468, %v587, 0
        %597 = vmatpush.msra.mxu0 0.0
        %598 = vmatpush.msra.mxu0 0.0
        %599 = vmatpush.msra.mxu0 0.0
        %600 = vmatpush.msra.mxu0 0.0
        %601 = vmatpush.msra.mxu0 0.0
        %602 = vmatpush.msra.mxu0 0.0
        %603 = vmatpush.msra.mxu0 0.0
        %604 = vmatpush.msra.mxu0 0.0
        %605 = vmatpush.msra.mxu0 0.0
        %606 = vmatpush.msra.mxu0 0.0
        %607 = vmatpush.msra.mxu0 0.0
        %608 = vmatpush.msra.mxu0 0.0
        %609 = vmatpush.msra.mxu0 %v586
        %610 = vmatpush.msra.mxu0 %v585
        %611 = vmatpush.msra.mxu0 %v584
        %612 = vmatpush.msra.mxu0 %v583
        %613 = vmatmul.f32.gmra.mxu0 %v595
        %v614 = vpop.f32.mrf.mxu0
        %v615 = vadd.f32 %v592, %v614
        %616 = vdwg.mxu0
        %617 = vst [vmem:[%s323] sm:$0x7] %v615
        %s618 = sand.u32 %s225, 1
        %s619 = scalar_lea.sflag [#allocation3], %s618
        %s620 = sand.u32 %s225, 1
        %s621 = smul.addr %s620, 4
        %s622 = scalar_lea.vmem [#allocation2], %s621
        // Predicated region
        $region57: #{tpu_custom_call.1} parent=55 // pred_check
          %p623 = pneg %p235
        $region58: #{tpu_custom_call.1} parent=55 // pred_check_branch
          %625 = sbr.rel (%p623) target = $region60
        $region59: #{tpu_custom_call.1} parent=55 // pred_region
          %627 = vsyncadd %s619, 0
          %s628 = smul.addr %s23, 4
          %s629 = scalar_lea.hbm %s9, %s628
          %s631 = sshll.u32 %s622, 4
          %s632 = int_to_ptr.vmem [resolvable:$true] %s631
          %s633 = sshll.u32 %s629, 4
          %s634 = int_to_ptr.hbm [resolvable:$true] %s633
          %636 = dma.vmem_to_hbm [thread:$0]  %s632, 64, %s634, %s619
        $region60: #{tpu_custom_call.1} parent=55 // pred_fallthru
          _
      $region56: #{tpu_custom_call.1} parent=5 // pred_fallthru
        _
      %p637 = scmp.le.s32.totalorder 2, %s18
      // Predicated region
      $region61: #{tpu_custom_call.1} parent=5 // pred_check
        %p638 = pneg %p637
      $region62: #{tpu_custom_call.1} parent=5 // pred_check_branch
        %640 = sbr.rel (%p638) target = $region64
      $region63: #{tpu_custom_call.1} parent=5 // pred_region
        %s641 = ssub.s32 %s18, 2
        // Predicated region
        $region65: #{tpu_custom_call.1} parent=63 // pred_check
          %p642 = pneg %p241
        $region66: #{tpu_custom_call.1} parent=63 // pred_check_branch
          %644 = sbr.rel (%p642) target = $region68
        $region67: #{tpu_custom_call.1} parent=63 // pred_region
          %s645 = sand.u32 %s226, 1
          %s646 = scalar_lea.sflag [#allocation3], %s645
          %s647 = sand.u32 %s226, 1
          %s648 = smul.addr %s647, 4
          %s649 = scalar_lea.vmem [#allocation2], %s648
          %651 = dma.done %s646, 64
        $region68: #{tpu_custom_call.1} parent=63 // pred_fallthru
          _
      $region64: #{tpu_custom_call.1} parent=5 // pred_fallthru
        _
    $region6: #{tpu_custom_call.1} parent=1 // loop_footer
      %s22 = sadd.s32 1, %s18
    $region7: #{tpu_custom_call.1} parent=1 // loop_footer_branch
      %17 = sbr.rel target = $region3
    $region8: #{tpu_custom_call.1} parent=1 // loop_exit
      _
    %652 = vsyncpa [#allocation3], 1
    %s653 = scalar_lea.sflag [#allocation3], 1
    %654 = vsyncpa %s653, 1

</llo_original>
